<compile_context>
chip_gen: v7x
topology: tpu7x:2x2x1
jax: 0.10.0
libtpu: 0.0.40
codegen_flags: <defaults>
</compile_context>

<pallas_src>
import functools

import jax
import jax.numpy as jnp
from jax.experimental import pallas as pl
from jax.experimental.pallas import tpu as pltpu


def _right_left_delta_kernel(x_ref, y_ref, o_ref, *, use_roll, compute_dtype):
    # x_ref: (TR, w)   scores (input dtype)
    # y_ref: (TR, 1)   int32 reference labels
    # o_ref: (TR, w-1) output
    x = x_ref[...].astype(compute_dtype)
    _, w = x.shape
    y = y_ref[...]                                            # (TR, 1) int32
    # (1, w-1) iota; broadcasting against the (TR, 1) labels avoids a block-sized
    # int32 intermediate.
    idx = jax.lax.broadcasted_iota(jnp.int32, (1, w - 1), dimension=1)
    left_mask = idx < y                                       # (TR, w-1) bool

    if use_roll:
        # nxt[:, j] = x[:, (j+1) % w]; lane rotation runs on the XLU (free slot),
        # no materialized lane-shifted slice copy.  Wrap column is dropped below.
        nxt = pltpu.roll(x, shift=w - 1, axis=1)
        diff = (x - nxt)[:, : w - 1]
    else:
        # Non-128-aligned class count: plain slice-subtract (lane-shifted copy).
        diff = x[:, : w - 1] - x[:, 1:]

    # out[:, j] = diff if j < label else -diff ; full-block, lane-dense store.
    o_ref[...] = jnp.where(left_mask, diff, -diff).astype(o_ref.dtype)


def _pick_row_tile(h, w, in_bytes, out_bytes, compute_bytes,
                   block_budget_bytes=2 << 20, min_grid_steps=8):
    """Largest sublane-aligned row tile whose VMEM footprint fits the block budget.

    Per row of a block we account for:
      * BlockSpec buffers (double-buffered): input (w*in_bytes) + output
        ((w-1)*out_bytes) + label block -- a (tr, 1) int32 block is padded to
        128 lanes, i.e. 512 B/row, NOT 4 B;
      * ~4 block-sized compute-dtype intermediates (x, rolled/shifted copy, diff,
        selected result) living in vregs / compiler scratch (single-buffered).
    """
    per_row = (2 * (w * in_bytes + (w - 1) * out_bytes + 128 * 4)
               + 4 * w * compute_bytes)
    tr = max(8, block_budget_bytes // max(per_row, 1))
    # Keep at least `min_grid_steps` grid steps when the batch is large enough so
    # the HBM<->VMEM double-buffer has a steady state to overlap into.
    if h > min_grid_steps * 8:
        tr = min(tr, pl.cdiv(h, min_grid_steps))
    if tr >= h:
        return h
    return max(8, (tr // 8) * 8)


def right_and_left_delta(inputs, rlabels, *, row_tile=None,
                         vmem_limit_bytes=32 * 1024 * 1024,
                         core_parallel=False):
    """inputs: (h, w) float scores; rlabels: (h,) int. Returns (h, w-1) in inputs.dtype."""
    assert inputs.ndim == 2, "`inputs` must be (nbr_samples, nbr_classes)"
    assert inputs.shape[1] > 1, "Number of classes must be > 1"
    assert rlabels.ndim == 1 and rlabels.shape[0] == inputs.shape[0]

    h, w = inputs.shape
    out_dtype = inputs.dtype
    y2d = rlabels.astype(jnp.int32).reshape(h, 1)

    in_dtype = jnp.dtype(inputs.dtype)
    # bf16 fast path: keep the whole elementwise chain in bf16 (bf16 VALU exists on
    # v6e/v7x); result differs from an f32-then-cast chain by <=1 ulp of bf16.
    # TODO(synk): on v5e (no bf16 VALU) an explicit f32 upcast may schedule better.
    if in_dtype in (jnp.dtype(jnp.bfloat16), jnp.dtype(jnp.float32)):
        compute_dtype = inputs.dtype
    else:
        compute_dtype = jnp.float32

    in_bytes = in_dtype.itemsize
    out_bytes = jnp.dtype(out_dtype).itemsize
    compute_bytes = jnp.dtype(compute_dtype).itemsize

    if row_tile is None:
        tr = _pick_row_tile(h, w, in_bytes, out_bytes, compute_bytes)
    else:
        tr = min(int(row_tile), h)
    if tr < h:
        tr = max(8, (tr // 8) * 8)  # sublane-aligned unless it is the full dim
    else:
        tr = h

    use_roll = (w % 128 == 0)
    kernel = functools.partial(_right_left_delta_kernel,
                               use_roll=use_roll, compute_dtype=compute_dtype)

    grid = (pl.cdiv(h, tr),)

    # Pure HBM streaming: ~1 read + 1 write per element, ~3 VALU ops per element.
    cost = pl.CostEstimate(
        flops=3 * h * (w - 1),
        transcendentals=0,
        bytes_accessed=h * w * in_bytes + h * 4 + h * (w - 1) * out_bytes,
    )

    # On v7x (2 TCs/chip) set core_parallel=True to shard rows across both cores;
    # on v5e/v6e (1 TC) the default "parallel" is equivalent.
    row_sem = pltpu.CORE_PARALLEL if core_parallel else "parallel"

    return pl.pallas_call(
        kernel,
        out_shape=jax.ShapeDtypeStruct((h, w - 1), out_dtype),
        grid_spec=pltpu.PrefetchScalarGridSpec(
            num_scalar_prefetch=0,
            grid=grid,
            in_specs=[
                pl.BlockSpec((tr, w), lambda i: (i, 0)),
                pl.BlockSpec((tr, 1), lambda i: (i, 0)),
            ],
            # Output block's last dim equals the full array dim (w-1): legal
            # regardless of 128-alignment; costs only a masked tail vst per row
            # of vregs and removes the extra full-HBM-pass slice in the wrapper.
            out_specs=pl.BlockSpec((tr, w - 1), lambda i: (i, 0)),
        ),
        compiler_params=pltpu.CompilerParams(
            dimension_semantics=(row_sem,),
            vmem_limit_bytes=vmem_limit_bytes,
        ),
        cost_estimate=cost,
    )(inputs, y2d)


def _reference(inputs, rlabels, compute_dtype=jnp.float32):
    """Pure-JAX reference matching the PyTorch module semantics."""
    x = inputs.astype(compute_dtype)
    seeleft = x[:, :-1] - x[:, 1:]
    idx = jnp.arange(seeleft.shape[1])[None, :]
    y = rlabels.reshape(-1, 1)
    return jnp.where(idx < y, seeleft, -seeleft).astype(inputs.dtype)


def _check(h, w, key, dtype=jnp.float32, **kw):
    k1, k2 = jax.random.split(key)
    inputs = jax.random.normal(k1, (h, w), dtype=jnp.float32).astype(dtype)
    rlabels = jax.random.randint(k2, (h,), 0, w, dtype=jnp.int32)
    out = jax.block_until_ready(right_and_left_delta(inputs, rlabels, **kw))
    compute_dtype = dtype if dtype in (jnp.bfloat16, jnp.float32) else jnp.float32
    ref = _reference(inputs, rlabels, compute_dtype=compute_dtype)
    assert out.shape == (h, w - 1), out.shape
    tol = 1e-6 if dtype == jnp.float32 else 1e-2
    assert jnp.allclose(out.astype(jnp.float32), ref.astype(jnp.float32),
                        atol=tol, rtol=tol), f"mismatch at shape ({h},{w},{dtype})"


if __name__ == "__main__":
    key = jax.random.PRNGKey(0)
    k0, k1, k2, k3 = jax.random.split(key, 4)

    _check(64, 16, k0)                        # single-block grid, slice-subtract path
    _check(128, 256, k1, row_tile=32)         # multi-block grid, XLU-roll path
    _check(48, 130, k2, row_tile=16)          # multi-block grid, non-128-aligned width
    _check(64, 256, k3, dtype=jnp.bfloat16)   # bf16 fast path (roll, bf16 VALU)

    print("KERNEL_OK")
</pallas_src>

<mosaic_0001>
module attributes {stable_mosaic.version = 11 : i64} {
  func.func @_right_left_delta_kernel(%arg0: i32, %arg1: memref<64x16xf32, #tpu.memory_space<vmem>>, %arg2: memref<64x1xi32, #tpu.memory_space<vmem>>, %arg3: memref<64x15xf32, #tpu.memory_space<vmem>>) attributes {dimension_semantics = [#tpu.dimension_semantics<parallel>], iteration_bounds = array<i64: 1>, scalar_prefetch = 0 : i64, scratch_operands = 0 : i64, tpu.core_type = #tpu.core_type<tc>, window_params = [{transform_indices = @transform_0, window_bounds = array<i64: 64, 16>}, {transform_indices = @transform_1, window_bounds = array<i64: 64, 1>}, {transform_indices = @transform_2, window_bounds = array<i64: 64, 15>}]} {
    %c0 = arith.constant 0 : index
    %c0_0 = arith.constant 0 : index
    %0 = vector.load %arg1[%c0, %c0_0] : memref<64x16xf32, #tpu.memory_space<vmem>>, vector<64x16xf32>
    %c0_1 = arith.constant 0 : index
    %c0_2 = arith.constant 0 : index
    %1 = vector.load %arg2[%c0_1, %c0_2] : memref<64x1xi32, #tpu.memory_space<vmem>>, vector<64x1xi32>
    %2 = tpu.iota {dimensions = array<i32: 1>} : vector<1x15xi32>
    %3 = vector.broadcast %2 : vector<1x15xi32> to vector<64x15xi32>
    %4 = vector.broadcast %1 : vector<64x1xi32> to vector<64x15xi32>
    %5 = arith.cmpi slt, %3, %4 : vector<64x15xi32>
    %6 = vector.extract_strided_slice %0 {offsets = [0, 0], sizes = [64, 15], strides = [1, 1]} : vector<64x16xf32> to vector<64x15xf32>
    %7 = vector.extract_strided_slice %0 {offsets = [0, 1], sizes = [64, 15], strides = [1, 1]} : vector<64x16xf32> to vector<64x15xf32>
    %8 = arith.subf %6, %7 : vector<64x15xf32>
    %cst = arith.constant 0.000000e+00 : f32
    %9 = vector.broadcast %cst : f32 to vector<64x15xf32>
    %10 = arith.subf %9, %8 : vector<64x15xf32>
    %11 = arith.select %5, %8, %10 : vector<64x15xi1>, vector<64x15xf32>
    %c0_3 = arith.constant 0 : index
    %c0_4 = arith.constant 0 : index
    %12 = vector.load %arg3[%c0_3, %c0_4] : memref<64x15xf32, #tpu.memory_space<vmem>>, vector<64x15xf32>
    tpu.vector_store %arg3[%c0_3, %c0_4], %11 {strides = array<i32>} : memref<64x15xf32, #tpu.memory_space<vmem>>, vector<64x15xf32>,
    return
  }
  func.func @transform_0(%arg0: i32) -> (i32, i32) {
    %c0_i32 = arith.constant 0 : i32
    %c0_i32_0 = arith.constant 0 : i32
    return %arg0, %c0_i32 : i32, i32
  }
  func.func @transform_1(%arg0: i32) -> (i32, i32) {
    %c0_i32 = arith.constant 0 : i32
    %c0_i32_0 = arith.constant 0 : i32
    return %arg0, %c0_i32 : i32, i32
  }
  func.func @transform_2(%arg0: i32) -> (i32, i32) {
    %c0_i32 = arith.constant 0 : i32
    %c0_i32_0 = arith.constant 0 : i32
    return %arg0, %c0_i32 : i32, i32
  }
}

</mosaic_0001>

<llo_original>
// kernel: tpu_custom_call.1
$region0: #{tpu_custom_call.1}
  #allocation0 [shape = 'u32[]', space=smem, size = 0x4, offset = 0x4, fixed_abs, tag = 'smem constant byte address 0x4 - core index']
  #allocation1 [shape = 'u32[144,128]{1,0:T(1,128)}', space=vmem, size = 0x12000, scoped, tag = 'internal scratch']
  %s0 = inlined_call_operand.vmem [shape: f32[64,16], index: 0, kind: input, shape index: {}]
  %s1 = inlined_call_operand.vmem [shape: s32[64,1], index: 1, kind: input, shape index: {}]
  %s2 = inlined_call_operand.vmem [shape: f32[64,15], index: 2, kind: output, shape index: {}]
  %s3 = sld [smem:[#allocation0]]
  $region18: #{tpu_custom_call.1} parent=0
    _
  %s5 = ssub.s32 1, %s3
  %s6 = scalar_select 0, %s5, %s3
  // Predicated region
  $region2: #{tpu_custom_call.1} parent=0 // pred_check
    _
  $region3: #{tpu_custom_call.1} parent=0 // pred_check_branch
    %8 = sbr.rel (0) target = $region5
  $region4: #{tpu_custom_call.1} parent=0 // pred_region
    _
  $region5: #{tpu_custom_call.1} parent=0 // pred_fallthru
    _
  // Predicated region
  $region6: #{tpu_custom_call.1} parent=0 // pred_check
    _
  $region7: #{tpu_custom_call.1} parent=0 // pred_check_branch
    %10 = sbr.rel (0) target = $region9
  $region8: #{tpu_custom_call.1} parent=0 // pred_region
    _
  $region9: #{tpu_custom_call.1} parent=0 // pred_fallthru
    _
  %v11 = vld [vmem:[%s0] sm:$0xff]
  %v12 = vld [vmem:[%s0 + $0x8] sm:$0xff]
  %v13 = vld [vmem:[%s0 + $0x10] sm:$0xff]
  %v14 = vld [vmem:[%s0 + $0x18] sm:$0xff]
  %v15 = vld [vmem:[%s0 + $0x20] sm:$0xff]
  %v16 = vld [vmem:[%s0 + $0x28] sm:$0xff]
  %v17 = vld [vmem:[%s0 + $0x30] sm:$0xff]
  %v18 = vld [vmem:[%s0 + $0x38] sm:$0xff]
  %v19 = vld [vmem:[%s1] sm:$0xff]
  %v20 = vld [vmem:[%s1 + $0x8] sm:$0xff]
  %v21 = vld [vmem:[%s1 + $0x10] sm:$0xff]
  %v22 = vld [vmem:[%s1 + $0x18] sm:$0xff]
  %v23 = vld [vmem:[%s1 + $0x20] sm:$0xff]
  %v24 = vld [vmem:[%s1 + $0x28] sm:$0xff]
  %v25 = vld [vmem:[%s1 + $0x30] sm:$0xff]
  %v26 = vld [vmem:[%s1 + $0x38] sm:$0xff]
  %v27 = vlaneseq
  %v28 = vand.u32 %v27, 127
  %29 = vset.pattern.permute.xlu0 0
  %30 = vperm.xlu0 %29, %v19
  %v31 = vpop.permute.xlu0 %30
  %32 = vset.pattern.permute.xlu0 0
  %33 = vperm.xlu0 %32, %v20
  %v34 = vpop.permute.xlu0 %33
  %35 = vset.pattern.permute.xlu0 0
  %36 = vperm.xlu0 %35, %v21
  %v37 = vpop.permute.xlu0 %36
  %38 = vset.pattern.permute.xlu0 0
  %39 = vperm.xlu0 %38, %v22
  %v40 = vpop.permute.xlu0 %39
  %41 = vset.pattern.permute.xlu0 0
  %42 = vperm.xlu0 %41, %v23
  %v43 = vpop.permute.xlu0 %42
  %44 = vset.pattern.permute.xlu0 0
  %45 = vperm.xlu0 %44, %v24
  %v46 = vpop.permute.xlu0 %45
  %47 = vset.pattern.permute.xlu0 0
  %48 = vperm.xlu0 %47, %v25
  %v49 = vpop.permute.xlu0 %48
  %50 = vset.pattern.permute.xlu0 0
  %51 = vperm.xlu0 %50, %v26
  %v52 = vpop.permute.xlu0 %51
  %vm53 = vcmp.lt.s32.totalorder %v28, %v31
  %vm54 = vcmp.lt.s32.totalorder %v28, %v34
  %vm55 = vcmp.lt.s32.totalorder %v28, %v37
  %vm56 = vcmp.lt.s32.totalorder %v28, %v40
  %vm57 = vcmp.lt.s32.totalorder %v28, %v43
  %vm58 = vcmp.lt.s32.totalorder %v28, %v46
  %vm59 = vcmp.lt.s32.totalorder %v28, %v49
  %vm60 = vcmp.lt.s32.totalorder %v28, %v52
  %69 = vrot.lane.b32.xlu0 %v11, 127
  %v70 = vpop.permute.xlu0 %69
  %71 = vrot.lane.b32.xlu0 %v12, 127
  %v72 = vpop.permute.xlu0 %71
  %73 = vrot.lane.b32.xlu0 %v13, 127
  %v74 = vpop.permute.xlu0 %73
  %75 = vrot.lane.b32.xlu0 %v14, 127
  %v76 = vpop.permute.xlu0 %75
  %77 = vrot.lane.b32.xlu0 %v15, 127
  %v78 = vpop.permute.xlu0 %77
  %79 = vrot.lane.b32.xlu0 %v16, 127
  %v80 = vpop.permute.xlu0 %79
  %81 = vrot.lane.b32.xlu0 %v17, 127
  %v82 = vpop.permute.xlu0 %81
  %83 = vrot.lane.b32.xlu0 %v18, 127
  %v84 = vpop.permute.xlu0 %83
  %v93 = vsub.f32 %v11, %v70
  %v94 = vsub.f32 %v12, %v72
  %v95 = vsub.f32 %v13, %v74
  %v96 = vsub.f32 %v14, %v76
  %v97 = vsub.f32 %v15, %v78
  %v98 = vsub.f32 %v16, %v80
  %v99 = vsub.f32 %v17, %v82
  %v100 = vsub.f32 %v18, %v84
  %v101 = vsub.f32 0.0, %v93
  %v102 = vsub.f32 0.0, %v94
  %v103 = vsub.f32 0.0, %v95
  %v104 = vsub.f32 0.0, %v96
  %v105 = vsub.f32 0.0, %v97
  %v106 = vsub.f32 0.0, %v98
  %v107 = vsub.f32 0.0, %v99
  %v108 = vsub.f32 0.0, %v100
  %v109 = vsel %vm53, %v93, %v101
  %v110 = vsel %vm54, %v94, %v102
  %v111 = vsel %vm55, %v95, %v103
  %v112 = vsel %vm56, %v96, %v104
  %v113 = vsel %vm57, %v97, %v105
  %v114 = vsel %vm58, %v98, %v106
  %v115 = vsel %vm59, %v99, %v107
  %v116 = vsel %vm60, %v100, %v108
  %vm117 = vcmask 121856
  %118 = vst.msk [vmem:[%s2] sm:$0xff] %vm117, %v109
  %119 = vst.msk [vmem:[%s2 + $0x8] sm:$0xff] %vm117, %v110
  %120 = vst.msk [vmem:[%s2 + $0x10] sm:$0xff] %vm117, %v111
  %121 = vst.msk [vmem:[%s2 + $0x18] sm:$0xff] %vm117, %v112
  %122 = vst.msk [vmem:[%s2 + $0x20] sm:$0xff] %vm117, %v113
  %123 = vst.msk [vmem:[%s2 + $0x28] sm:$0xff] %vm117, %v114
  %124 = vst.msk [vmem:[%s2 + $0x30] sm:$0xff] %vm117, %v115
  %125 = vst.msk [vmem:[%s2 + $0x38] sm:$0xff] %vm117, %v116
  // Predicated region
  $region10: #{tpu_custom_call.1} parent=0 // pred_check
    _
  $region11: #{tpu_custom_call.1} parent=0 // pred_check_branch
    %127 = sbr.rel (0) target = $region13
  $region12: #{tpu_custom_call.1} parent=0 // pred_region
    _
  $region13: #{tpu_custom_call.1} parent=0 // pred_fallthru
    _
  // Predicated region
  $region14: #{tpu_custom_call.1} parent=0 // pred_check
    _
  $region15: #{tpu_custom_call.1} parent=0 // pred_check_branch
    %129 = sbr.rel (0) target = $region17
  $region16: #{tpu_custom_call.1} parent=0 // pred_region
    _
  $region17: #{tpu_custom_call.1} parent=0 // pred_fallthru
    _

</llo_original>
